<compile_context>
chip_gen: v5e
topology: v5e:2x2
jax: 0.10.0
libtpu: 0.0.40
codegen_flags: <defaults>
</compile_context>

<pallas_src>
import functools

import jax
import jax.numpy as jnp
from jax.experimental import pallas as pl
from jax.experimental.pallas import tpu as pltpu


# ----------------------------------------------------------------------------
# Kernel bodies
# ----------------------------------------------------------------------------
def _attention_body(h_ref, patt_ref, feat_ref, wh_ref, bh_ref, wa_ref,
                    out_ref, *, mask=None, compute_dtype=jnp.float32):
    # h_ref:    (TB, rnn)           native dtype
    # patt_ref: (TB, att, hid)      native dtype
    # feat_ref: (TB, att, D)        native dtype
    # wh_ref:   (rnn, hid)          native dtype
    # bh_ref:   (1, hid)  f32       wa_ref: (1, hid)  f32
    # out_ref:  (TB, D)
    # mask:     (TB, att) f32 or None

    # h2att linear on the MXU, f32 accumulation.
    att_h = jnp.dot(h_ref[...], wh_ref[...],
                    preferred_element_type=jnp.float32) + bh_ref[...]  # (TB, hid) f32

    # tanh(p_att_feats + att_h) in compute_dtype (f32 on v5e / f32 inputs,
    # native bf16 on v6e/v7x when inputs are bf16).
    x = (patt_ref[...].astype(compute_dtype)
         + att_h.astype(compute_dtype)[:, None, :])                   # (TB, att, hid)
    dot = jnp.tanh(x)

    # alpha_net (hid -> 1): VPU multiply + lane reduction, f32 accumulation.
    # alpha_net bias dropped: softmax is shift-invariant (exact no-op).
    scores = jnp.sum(dot.astype(jnp.float32) * wa_ref[...][None, :, :],
                     axis=-1)                                          # (TB, att) f32

    # Fused (masked) softmax over att_size, numerically stable.
    m = jnp.max(scores, axis=-1, keepdims=True)
    e = jnp.exp(scores - m)
    if mask is not None:
        e = e * mask
    w = e / jnp.sum(e, axis=-1, keepdims=True)                         # (TB, att) f32

    # Weighted sum over att_size on the MXU: (TB,1,att) x (TB,att,D) -> (TB,1,D)
    # No f32 upcast of the big att_feats stream; accumulate in f32.
    feat = feat_ref[...]
    wq = w.astype(feat.dtype)[:, None, :]
    out = jnp.einsum('bqa,bad->bqd', wq, feat,
                     preferred_element_type=jnp.float32)               # (TB, 1, D) f32
    out_ref[...] = out[:, 0, :].astype(out_ref.dtype)


def _attention_kernel(h_ref, patt_ref, feat_ref, wh_ref, bh_ref, wa_ref,
                      out_ref, *, compute_dtype):
    _attention_body(h_ref, patt_ref, feat_ref, wh_ref, bh_ref, wa_ref,
                    out_ref, mask=None, compute_dtype=compute_dtype)


def _attention_kernel_masked(h_ref, patt_ref, feat_ref, mask_ref,
                             wh_ref, bh_ref, wa_ref, out_ref, *,
                             compute_dtype):
    mask = mask_ref[...].astype(jnp.float32)                           # (TB, att)
    _attention_body(h_ref, patt_ref, feat_ref, wh_ref, bh_ref, wa_ref,
                    out_ref, mask=mask, compute_dtype=compute_dtype)


# ----------------------------------------------------------------------------
# Block-size / VMEM heuristics
# ----------------------------------------------------------------------------
def _tpu_props():
    """(vmem_limit_bytes, is_v5, two_tensorcores) with safe fallbacks."""
    vmem_cap = 128 << 20
    try:
        vmem_cap = int(pltpu.get_tpu_info().vmem_capacity_bytes)
    except Exception:
        pass
    kind = ""
    try:
        kind = jax.devices()[0].device_kind.lower()
    except Exception:
        pass
    # Scoped VMEM limit we request: half of physical, capped at 64 MiB.
    vmem_limit = min(vmem_cap // 2, 64 << 20)
    return vmem_limit, ("v5" in kind), ("v7" in kind)


def _select_block_b(batch, per_row_bytes, budget_bytes, prefer_two_blocks):
    tb = budget_bytes // max(per_row_bytes, 1)
    tb = int(min(tb, 512))
    tb -= tb % 8
    tb = max(tb, 8)
    if tb >= batch:
        tb = batch
        # Keep >= 2 grid steps so both TensorCores get work on v7x.
        if prefer_two_blocks and batch >= 16 and batch % 16 == 0:
            tb = batch // 2
    return tb


# ----------------------------------------------------------------------------
# Wrapper
# ----------------------------------------------------------------------------
def attention_pallas(h, att_feats, p_att_feats, w_h2att, b_h2att,
                     w_alpha, b_alpha, att_masks=None, block_b=None):
    B, rnn_size = h.shape
    D = att_feats.shape[-1]
    att_size = int(att_feats.size) // (B * D)
    att_hid = p_att_feats.shape[-1]
    out_dtype = att_feats.dtype

    feats = att_feats.reshape(B, att_size, D)
    patt = p_att_feats.reshape(B, att_size, att_hid)

    vmem_limit, is_v5, two_cores = _tpu_props()
    budget = int(vmem_limit * 0.6)

    # Per-batch-row working set: double-buffered input tiles + f32 tanh /
    # score-product intermediates + small rows.
    per_row = (att_size * att_hid * patt.dtype.itemsize * 2
               + att_size * D * feats.dtype.itemsize * 2
               + 2 * att_size * att_hid * 4
               + att_size * 8
               + (rnn_size + D) * 4 * 2)

    tb = _select_block_b(B, per_row, budget, prefer_two_blocks=two_cores)
    if block_b is not None:
        tb = min(int(block_b), B)
        if tb < B:
            tb = max(8, tb - tb % 8)     # sublane-dense when not full-batch
    grid_b = pl.cdiv(B, tb)

    # Elementwise (add/tanh) compute dtype: keep bf16 on v6e/v7x, f32 on v5e.
    compute_dtype = jnp.float32
    if patt.dtype == jnp.bfloat16 and not is_v5:
        compute_dtype = jnp.bfloat16

    # Small resident parameters: h2att weight stays in native dtype (bf16 MXU
    # path when bf16); tiny bias / alpha rows in f32.
    wh = w_h2att                                           # (rnn, hid)
    bh = b_h2att.reshape(1, att_hid).astype(jnp.float32)   # (1, hid)
    wa = w_alpha.reshape(1, att_hid).astype(jnp.float32)   # (1, hid)
    # alpha_net bias intentionally unused (exact no-op under softmax).

    def _nbytes(x):
        return int(x.size) * x.dtype.itemsize

    big_in_specs = [
        pl.BlockSpec((tb, rnn_size), lambda b: (b, 0)),            # h
        pl.BlockSpec((tb, att_size, att_hid), lambda b: (b, 0, 0)),  # p_att_feats
        pl.BlockSpec((tb, att_size, D), lambda b: (b, 0, 0)),        # att_feats
    ]
    weight_specs = [
        pl.BlockSpec((rnn_size, att_hid), lambda b: (0, 0)),       # W h2att
        pl.BlockSpec((1, att_hid), lambda b: (0, 0)),              # b h2att
        pl.BlockSpec((1, att_hid), lambda b: (0, 0)),              # w alpha
    ]

    flops = (2 * B * rnn_size * att_hid          # h2att matmul
             + B * att_size * att_hid            # add
             + 2 * B * att_size * att_hid        # alpha mul+reduce
             + 2 * B * att_size * D)             # weighted sum (MXU)
    transcendentals = B * att_size * att_hid + B * att_size
    bytes_accessed = (_nbytes(h) + _nbytes(patt) + _nbytes(feats)
                      + _nbytes(wh) + _nbytes(bh) + _nbytes(wa)
                      + B * D * jnp.dtype(out_dtype).itemsize)

    if att_masks is not None:
        mask2 = att_masks.reshape(B, att_size)   # native dtype; cast in-kernel
        kernel = functools.partial(_attention_kernel_masked,
                                   compute_dtype=compute_dtype)
        inputs = (h, patt, feats, mask2, wh, bh, wa)
        in_specs = (big_in_specs
                    + [pl.BlockSpec((tb, att_size), lambda b: (b, 0))]
                    + weight_specs)
        bytes_accessed += _nbytes(mask2)
    else:
        kernel = functools.partial(_attention_kernel,
                                   compute_dtype=compute_dtype)
        inputs = (h, patt, feats, wh, bh, wa)
        in_specs = big_in_specs + weight_specs

    out = pl.pallas_call(
        kernel,
        out_shape=jax.ShapeDtypeStruct((B, D), out_dtype),
        grid_spec=pltpu.PrefetchScalarGridSpec(
            num_scalar_prefetch=0,
            grid=(grid_b,),
            in_specs=in_specs,
            out_specs=pl.BlockSpec((tb, D), lambda b: (b, 0)),
        ),
        compiler_params=pltpu.CompilerParams(
            dimension_semantics=("parallel",),
            vmem_limit_bytes=int(vmem_limit)),
        cost_estimate=pl.CostEstimate(flops=flops,
                                      transcendentals=transcendentals,
                                      bytes_accessed=bytes_accessed),
    )(*inputs)

    return out


# ----------------------------------------------------------------------------
# Pure-JAX reference mirroring the PyTorch forward
# ----------------------------------------------------------------------------
def attention_ref(h, att_feats, p_att_feats, w_h2att, b_h2att,
                  w_alpha, b_alpha, att_masks=None):
    B = att_feats.shape[0]
    D = att_feats.shape[-1]
    att_size = int(att_feats.size) // (B * D)
    att_hid = p_att_feats.shape[-1]
    att = p_att_feats.reshape(B, att_size, att_hid)
    att_h = h @ w_h2att + b_h2att
    dot = jnp.tanh(att + att_h[:, None, :])
    dot = dot.reshape(-1, att_hid) @ w_alpha.reshape(att_hid, 1) + b_alpha
    dot = dot.reshape(B, att_size)
    weight = jax.nn.softmax(dot, axis=1)
    if att_masks is not None:
        weight = weight * att_masks.reshape(B, att_size).astype(weight.dtype)
        weight = weight / jnp.sum(weight, axis=1, keepdims=True)
    feats = att_feats.reshape(B, att_size, D)
    return jnp.einsum('ba,bad->bd', weight, feats)


if __name__ == "__main__":
    def make_inputs(B, att_size, rnn_size, att_hid, keep=12):
        key = jax.random.PRNGKey(0)
        k1, k2, k3, k4, k5, k6, k7, _ = jax.random.split(key, 8)
        h = jax.random.normal(k1, (B, rnn_size), jnp.float32)
        att_feats = jax.random.normal(k2, (B, att_size, rnn_size), jnp.float32)
        p_att_feats = jax.random.normal(k3, (B, att_size, att_hid), jnp.float32)
        w_h2att = jax.random.uniform(k4, (rnn_size, att_hid), jnp.float32,
                                     -1.0 / jnp.sqrt(rnn_size),
                                     1.0 / jnp.sqrt(rnn_size))
        b_h2att = jax.random.uniform(k5, (att_hid,), jnp.float32,
                                     -1.0 / jnp.sqrt(rnn_size),
                                     1.0 / jnp.sqrt(rnn_size))
        w_alpha = jax.random.uniform(k6, (att_hid,), jnp.float32,
                                     -1.0 / jnp.sqrt(att_hid),
                                     1.0 / jnp.sqrt(att_hid))
        b_alpha = jax.random.uniform(k7, (1,), jnp.float32,
                                     -1.0 / jnp.sqrt(att_hid),
                                     1.0 / jnp.sqrt(att_hid))
        att_masks = (jnp.arange(att_size)[None, :] < keep).astype(jnp.float32)
        att_masks = jnp.broadcast_to(att_masks, (B, att_size))
        return (h, att_feats, p_att_feats, w_h2att, b_h2att,
                w_alpha, b_alpha, att_masks)

    # ---- primary small test: B=8, att_size=16, rnn=32, att_hid=32 ----
    (h, att_feats, p_att_feats, w_h2att, b_h2att,
     w_alpha, b_alpha, att_masks) = make_inputs(8, 16, 32, 32)

    out_m = jax.block_until_ready(
        attention_pallas(h, att_feats, p_att_feats, w_h2att, b_h2att,
                         w_alpha, b_alpha, att_masks))
    ref_m = attention_ref(h, att_feats, p_att_feats, w_h2att, b_h2att,
                          w_alpha, b_alpha, att_masks)
    assert out_m.shape == (8, 32)
    assert jnp.allclose(out_m, ref_m, atol=1e-4, rtol=1e-4), "masked mismatch"

    out_u = jax.block_until_ready(
        attention_pallas(h, att_feats, p_att_feats, w_h2att, b_h2att,
                         w_alpha, b_alpha, None))
    ref_u = attention_ref(h, att_feats, p_att_feats, w_h2att, b_h2att,
                          w_alpha, b_alpha, None)
    assert out_u.shape == (8, 32)
    assert jnp.allclose(out_u, ref_u, atol=1e-4, rtol=1e-4), "unmasked mismatch"

    # ---- ragged-batch test (B not a multiple of tb; no wrapper-side pad) ----
    (h, att_feats, p_att_feats, w_h2att, b_h2att,
     w_alpha, b_alpha, att_masks) = make_inputs(10, 16, 32, 32)
    out_r = jax.block_until_ready(
        attention_pallas(h, att_feats, p_att_feats, w_h2att, b_h2att,
                         w_alpha, b_alpha, att_masks, block_b=8))
    ref_r = attention_ref(h, att_feats, p_att_feats, w_h2att, b_h2att,
                          w_alpha, b_alpha, att_masks)
    assert out_r.shape == (10, 32)
    assert jnp.allclose(out_r, ref_r, atol=1e-4, rtol=1e-4), "ragged mismatch"

    print("KERNEL_OK")
</pallas_src>

<mosaic_0001>
module attributes {stable_mosaic.version = 11 : i64} {
  func.func @_attention_kernel_masked(%arg0: i32, %arg1: memref<8x32xf32, #tpu.memory_space<vmem>>, %arg2: memref<8x16x32xf32, #tpu.memory_space<vmem>>, %arg3: memref<8x16x32xf32, #tpu.memory_space<vmem>>, %arg4: memref<8x16xf32, #tpu.memory_space<vmem>>, %arg5: memref<32x32xf32, #tpu.memory_space<vmem>>, %arg6: memref<1x32xf32, #tpu.memory_space<vmem>>, %arg7: memref<1x32xf32, #tpu.memory_space<vmem>>, %arg8: memref<8x32xf32, #tpu.memory_space<vmem>>) attributes {dimension_semantics = [#tpu.dimension_semantics<parallel>], iteration_bounds = array<i64: 1>, scalar_prefetch = 0 : i64, scratch_operands = 0 : i64, tpu.core_type = #tpu.core_type<tc>, window_params = [{transform_indices = @transform_0, window_bounds = array<i64: 8, 32>}, {transform_indices = @transform_1, window_bounds = array<i64: 8, 16, 32>}, {transform_indices = @transform_2, window_bounds = array<i64: 8, 16, 32>}, {transform_indices = @transform_3, window_bounds = array<i64: 8, 16>}, {pipeline_mode = #tpu.pipeline_mode<synchronous>, transform_indices = @transform_4, window_bounds = array<i64: 32, 32>}, {pipeline_mode = #tpu.pipeline_mode<synchronous>, transform_indices = @transform_5, window_bounds = array<i64: 1, 32>}, {pipeline_mode = #tpu.pipeline_mode<synchronous>, transform_indices = @transform_6, window_bounds = array<i64: 1, 32>}, {transform_indices = @transform_7, window_bounds = array<i64: 8, 32>}]} {
    %c0 = arith.constant 0 : index
    %c0_0 = arith.constant 0 : index
    %0 = vector.load %arg4[%c0, %c0_0] : memref<8x16xf32, #tpu.memory_space<vmem>>, vector<8x16xf32>
    %c0_1 = arith.constant 0 : index
    %c0_2 = arith.constant 0 : index
    %1 = vector.load %arg1[%c0_1, %c0_2] : memref<8x32xf32, #tpu.memory_space<vmem>>, vector<8x32xf32>
    %c0_3 = arith.constant 0 : index
    %c0_4 = arith.constant 0 : index
    %2 = vector.load %arg5[%c0_3, %c0_4] : memref<32x32xf32, #tpu.memory_space<vmem>>, vector<32x32xf32>
    %cst = arith.constant dense<0.000000e+00> : vector<8x32xf32>
    %3 = tpu.matmul %1, %2, %cst {dimension_numbers = #tpu.dot_dimension_numbers<[1], [0], [0], [1], [0, 0, 1, 1], [], []>} : vector<8x32xf32>, vector<32x32xf32>, vector<8x32xf32> -> vector<8x32xf32>
    %c0_5 = arith.constant 0 : index
    %c0_6 = arith.constant 0 : index
    %4 = vector.load %arg6[%c0_5, %c0_6] : memref<1x32xf32, #tpu.memory_space<vmem>>, vector<1x32xf32>
    %5 = vector.broadcast %4 : vector<1x32xf32> to vector<8x32xf32>
    %6 = arith.addf %3, %5 : vector<8x32xf32>
    %c0_7 = arith.constant 0 : index
    %c0_8 = arith.constant 0 : index
    %c0_9 = arith.constant 0 : index
    %7 = vector.load %arg2[%c0_7, %c0_8, %c0_9] : memref<8x16x32xf32, #tpu.memory_space<vmem>>, vector<8x16x32xf32>
    %8 = vector.shape_cast %6 : vector<8x32xf32> to vector<8x1x32xf32>
    %9 = vector.broadcast %8 : vector<8x1x32xf32> to vector<8x16x32xf32>
    %10 = arith.addf %7, %9 : vector<8x16x32xf32>
    %11 = math.tanh %10 : vector<8x16x32xf32>
    %c0_10 = arith.constant 0 : index
    %c0_11 = arith.constant 0 : index
    %12 = vector.load %arg7[%c0_10, %c0_11] : memref<1x32xf32, #tpu.memory_space<vmem>>, vector<1x32xf32>
    %13 = vector.shape_cast %12 : vector<1x32xf32> to vector<1x1x32xf32>
    %14 = vector.broadcast %13 : vector<1x1x32xf32> to vector<8x16x32xf32>
    %15 = arith.mulf %11, %14 : vector<8x16x32xf32>
    %cst_12 = arith.constant dense<0.000000e+00> : vector<8x16xf32>
    %16 = vector.multi_reduction <add>, %15, %cst_12 [2] : vector<8x16x32xf32> to vector<8x16xf32>
    %cst_13 = arith.constant dense<0xFF800000> : vector<8xf32>
    %17 = vector.multi_reduction <maximumf>, %16, %cst_13 [1] : vector<8x16xf32> to vector<8xf32>
    %18 = vector.shape_cast %17 : vector<8xf32> to vector<8x1xf32>
    %19 = vector.broadcast %18 : vector<8x1xf32> to vector<8x16xf32>
    %20 = arith.subf %16, %19 : vector<8x16xf32>
    %21 = math.exp %20 : vector<8x16xf32>
    %22 = arith.mulf %21, %0 : vector<8x16xf32>
    %cst_14 = arith.constant dense<0.000000e+00> : vector<8xf32>
    %23 = vector.multi_reduction <add>, %22, %cst_14 [1] : vector<8x16xf32> to vector<8xf32>
    %24 = vector.shape_cast %23 : vector<8xf32> to vector<8x1xf32>
    %25 = vector.broadcast %24 : vector<8x1xf32> to vector<8x16xf32>
    %26 = arith.divf %22, %25 : vector<8x16xf32>
    %c0_15 = arith.constant 0 : index
    %c0_16 = arith.constant 0 : index
    %c0_17 = arith.constant 0 : index
    %27 = vector.load %arg3[%c0_15, %c0_16, %c0_17] : memref<8x16x32xf32, #tpu.memory_space<vmem>>, vector<8x16x32xf32>
    %28 = vector.shape_cast %26 : vector<8x16xf32> to vector<8x1x16xf32>
    "tpu.trace_start"() <{level = 10 : i32, message = "bqa,bad->bqd"}> : () -> ()
    %cst_18 = arith.constant dense<0.000000e+00> : vector<8x1x32xf32>
    %29 = tpu.matmul %28, %27, %cst_18 {dimension_numbers = #tpu.dot_dimension_numbers<[2], [1], [1], [2], [0, 0, 0, 1, 1, 2], [0], [0]>} : vector<8x1x16xf32>, vector<8x16x32xf32>, vector<8x1x32xf32> -> vector<8x1x32xf32>
    "tpu.trace_stop"() : () -> ()
    %30 = vector.shape_cast %29 : vector<8x1x32xf32> to vector<8x32xf32>
    %c0_19 = arith.constant 0 : index
    %c0_20 = arith.constant 0 : index
    %31 = vector.load %arg8[%c0_19, %c0_20] : memref<8x32xf32, #tpu.memory_space<vmem>>, vector<8x32xf32>
    tpu.vector_store %arg8[%c0_19, %c0_20], %30 {strides = array<i32>} : memref<8x32xf32, #tpu.memory_space<vmem>>, vector<8x32xf32>,
    return
  }
  func.func @transform_0(%arg0: i32) -> (i32, i32) {
    %c0_i32 = arith.constant 0 : i32
    %c0_i32_0 = arith.constant 0 : i32
    return %arg0, %c0_i32 : i32, i32
  }
  func.func @transform_1(%arg0: i32) -> (i32, i32, i32) {
    %c0_i32 = arith.constant 0 : i32
    %c0_i32_0 = arith.constant 0 : i32
    %c0_i32_1 = arith.constant 0 : i32
    return %arg0, %c0_i32, %c0_i32_0 : i32, i32, i32
  }
  func.func @transform_2(%arg0: i32) -> (i32, i32, i32) {
    %c0_i32 = arith.constant 0 : i32
    %c0_i32_0 = arith.constant 0 : i32
    %c0_i32_1 = arith.constant 0 : i32
    return %arg0, %c0_i32, %c0_i32_0 : i32, i32, i32
  }
  func.func @transform_3(%arg0: i32) -> (i32, i32) {
    %c0_i32 = arith.constant 0 : i32
    %c0_i32_0 = arith.constant 0 : i32
    return %arg0, %c0_i32 : i32, i32
  }
  func.func @transform_4(%arg0: i32) -> (i32, i32) {
    %c0_i32 = arith.constant 0 : i32
    %c0_i32_0 = arith.constant 0 : i32
    %c0_i32_1 = arith.constant 0 : i32
    return %c0_i32, %c0_i32_0 : i32, i32
  }
  func.func @transform_5(%arg0: i32) -> (i32, i32) {
    %c0_i32 = arith.constant 0 : i32
    %c0_i32_0 = arith.constant 0 : i32
    %c0_i32_1 = arith.constant 0 : i32
    return %c0_i32, %c0_i32_0 : i32, i32
  }
  func.func @transform_6(%arg0: i32) -> (i32, i32) {
    %c0_i32 = arith.constant 0 : i32
    %c0_i32_0 = arith.constant 0 : i32
    %c0_i32_1 = arith.constant 0 : i32
    return %c0_i32, %c0_i32_0 : i32, i32
  }
  func.func @transform_7(%arg0: i32) -> (i32, i32) {
    %c0_i32 = arith.constant 0 : i32
    %c0_i32_0 = arith.constant 0 : i32
    return %arg0, %c0_i32 : i32, i32
  }
}

</mosaic_0001>

<llo_original>
// kernel: tpu_custom_call.1
$region0: #{tpu_custom_call.1}
  #allocation0 [shape = 'u32[]', space=smem, size = 0x4, offset = 0x4, fixed_abs, tag = 'smem constant byte address 0x4 - core index']
  #allocation1 [shape = 'u32[72,128]{1,0:T(1,128)}', space=vmem, size = 0x9000, scoped, tag = 'internal scratch']
  %s0 = inlined_call_operand.hbm [shape: f32[8,32], index: 0, kind: input, shape index: {}]
  %s1 = inlined_call_operand.hbm [shape: f32[8,16,32], index: 1, kind: input, shape index: {}]
  %s2 = inlined_call_operand.hbm [shape: f32[8,16,32], index: 2, kind: input, shape index: {}]
  %s3 = inlined_call_operand.hbm [shape: f32[8,16], index: 3, kind: input, shape index: {}]
  %s4 = inlined_call_operand.hbm [shape: f32[32,32], index: 4, kind: input, shape index: {}]
  %s5 = inlined_call_operand.vmem [shape: f32[1,32], index: 5, kind: input, shape index: {}]
  %s6 = inlined_call_operand.vmem [shape: f32[1,32], index: 6, kind: input, shape index: {}]
  %s7 = inlined_call_operand.hbm [shape: f32[8,32], index: 7, kind: output, shape index: {}]
  %s8 = sld [smem:[#allocation0]]
  $region58: #{tpu_custom_call.1} parent=0
    _
  %s10 = ssub.s32 1, %s8
  %s11 = scalar_select 0, %s10, %s8
  $region1: #{tpu_custom_call.1} parent=0
    #allocation2 [shape = 'u8[4096]{0}', space=vmem, size = 0x1000, scoped, tag = 'input window, operand 0, single buffered']
    #allocation3 [shape = 's32[1]{0}', space=sflag, size = 0x4, scoped, tag = 'scoped memory for tpu_custom_call.1']
    #allocation4 [shape = 's32[1]{0}', space=sflag, size = 0x4, scoped, tag = 'scoped memory for tpu_custom_call.1']
    #allocation5 [shape = 'u8[65536]{0}', space=vmem, size = 0x10000, scoped, tag = 'input window, operand 1, single buffered']
    #allocation6 [shape = 's32[1]{0}', space=sflag, size = 0x4, scoped, tag = 'scoped memory for tpu_custom_call.1']
    #allocation7 [shape = 'u8[65536]{0}', space=vmem, size = 0x10000, scoped, tag = 'input window, operand 2, single buffered']
    #allocation8 [shape = 'u8[4096]{0}', space=vmem, size = 0x1000, scoped, tag = 'input window, operand 3, single buffered']
    #allocation9 [shape = 's32[1]{0}', space=sflag, size = 0x4, scoped, tag = 'scoped memory for tpu_custom_call.1']
    #allocation10 [shape = 'u8[16384]{0}', space=vmem, size = 0x4000, scoped, tag = 'input window, operand 4, single buffered']
    #allocation11 [shape = 'u8[4096]{0}', space=vmem, size = 0x1000, scoped, tag = 'output window, operand 0, single buffered']
    %12 = vsyncpa [#allocation3], 0
    %13 = vsyncpa [#allocation6], 0
    %14 = vsyncpa [#allocation9], 0
    %15 = vsyncpa [#allocation4], 0
    // Predicated region
    $region2: #{tpu_custom_call.1} parent=1 // pred_check
      _
    $region3: #{tpu_custom_call.1} parent=1 // pred_check_branch
      %17 = sbr.rel (0) target = $region5
    $region4: #{tpu_custom_call.1} parent=1 // pred_region
      %19 = vsyncadd [#allocation3], 0
      %s21 = sshll.u32 %s0, 4
      %s22 = int_to_ptr.hbm [resolvable:$true] %s21
      %s23 = sshll.u32 [#allocation2], 4
      %s24 = int_to_ptr.vmem [resolvable:$true] %s23
      %26 = dma.hbm_to_vmem [thread:$0]  %s22, 128, %s24, [#allocation3]
    $region5: #{tpu_custom_call.1} parent=1 // pred_fallthru
      _
    // Predicated region
    $region6: #{tpu_custom_call.1} parent=1 // pred_check
      _
    $region7: #{tpu_custom_call.1} parent=1 // pred_check_branch
      %28 = sbr.rel (0) target = $region9
    $region8: #{tpu_custom_call.1} parent=1 // pred_region
      %30 = vsyncadd [#allocation6], 0
      %s31 = sshll.u32 %s1, 4
      %s32 = int_to_ptr.hbm [resolvable:$true] %s31
      %s33 = sshll.u32 [#allocation5], 4
      %s34 = int_to_ptr.vmem [resolvable:$true] %s33
      %39 = dma.hbm_to_vmem [thread:$0]  %s32, 2048, %s34, [#allocation6], 128, 128, 8
    $region9: #{tpu_custom_call.1} parent=1 // pred_fallthru
      _
    // Predicated region
    $region10: #{tpu_custom_call.1} parent=1 // pred_check
      _
    $region11: #{tpu_custom_call.1} parent=1 // pred_check_branch
      %41 = sbr.rel (0) target = $region13
    $region12: #{tpu_custom_call.1} parent=1 // pred_region
      %43 = vsyncadd [#allocation6], 0
      %s44 = sshll.u32 %s2, 4
      %s45 = int_to_ptr.hbm [resolvable:$true] %s44
      %s46 = sshll.u32 [#allocation7], 4
      %s47 = int_to_ptr.vmem [resolvable:$true] %s46
      %52 = dma.hbm_to_vmem [thread:$0]  %s45, 2048, %s47, [#allocation6], 128, 128, 8
    $region13: #{tpu_custom_call.1} parent=1 // pred_fallthru
      _
    // Predicated region
    $region14: #{tpu_custom_call.1} parent=1 // pred_check
      _
    $region15: #{tpu_custom_call.1} parent=1 // pred_check_branch
      %54 = sbr.rel (0) target = $region17
    $region16: #{tpu_custom_call.1} parent=1 // pred_region
      %56 = vsyncadd [#allocation9], 0
      %s58 = sshll.u32 %s3, 4
      %s59 = int_to_ptr.hbm [resolvable:$true] %s58
      %s60 = sshll.u32 [#allocation8], 4
      %s61 = int_to_ptr.vmem [resolvable:$true] %s60
      %63 = dma.hbm_to_vmem [thread:$0]  %s59, 128, %s61, [#allocation9]
    $region17: #{tpu_custom_call.1} parent=1 // pred_fallthru
      _
    // Predicated region
    $region18: #{tpu_custom_call.1} parent=1 // pred_check
      _
    $region19: #{tpu_custom_call.1} parent=1 // pred_check_branch
      %65 = sbr.rel (0) target = $region21
    $region20: #{tpu_custom_call.1} parent=1 // pred_region
      %67 = vsyncadd [#allocation9], 0
      %s68 = sshll.u32 %s4, 4
      %s69 = int_to_ptr.hbm [resolvable:$true] %s68
      %s70 = sshll.u32 [#allocation10], 4
      %s71 = int_to_ptr.vmem [resolvable:$true] %s70
      %76 = dma.hbm_to_vmem [thread:$0]  %s69, 512, %s71, [#allocation9], 128, 128, 8
    $region21: #{tpu_custom_call.1} parent=1 // pred_fallthru
      _
    // Predicated region
    $region22: #{tpu_custom_call.1} parent=1 // pred_check
      _
    $region23: #{tpu_custom_call.1} parent=1 // pred_check_branch
      %78 = sbr.rel (0) target = $region25
    $region24: #{tpu_custom_call.1} parent=1 // pred_region
      _
    $region25: #{tpu_custom_call.1} parent=1 // pred_fallthru
      _
    // Predicated region
    $region26: #{tpu_custom_call.1} parent=1 // pred_check
      _
    $region27: #{tpu_custom_call.1} parent=1 // pred_check_branch
      %80 = sbr.rel (0) target = $region29
    $region28: #{tpu_custom_call.1} parent=1 // pred_region
      _
    $region29: #{tpu_custom_call.1} parent=1 // pred_fallthru
      _
    // Predicated region
    $region30: #{tpu_custom_call.1} parent=1 // pred_check
      _
    $region31: #{tpu_custom_call.1} parent=1 // pred_check_branch
      %82 = sbr.rel (0) target = $region33
    $region32: #{tpu_custom_call.1} parent=1 // pred_region
      %84 = dma.done [#allocation3], 128
    $region33: #{tpu_custom_call.1} parent=1 // pred_fallthru
      _
    // Predicated region
    $region34: #{tpu_custom_call.1} parent=1 // pred_check
      _
    $region35: #{tpu_custom_call.1} parent=1 // pred_check_branch
      %86 = sbr.rel (0) target = $region37
    $region36: #{tpu_custom_call.1} parent=1 // pred_region
      %88 = dma.done [#allocation6], 2048
    $region37: #{tpu_custom_call.1} parent=1 // pred_fallthru
      _
    // Predicated region
    $region38: #{tpu_custom_call.1} parent=1 // pred_check
      _
    $region39: #{tpu_custom_call.1} parent=1 // pred_check_branch
      %90 = sbr.rel (0) target = $region41
    $region40: #{tpu_custom_call.1} parent=1 // pred_region
      %92 = dma.done [#allocation6], 2048
    $region41: #{tpu_custom_call.1} parent=1 // pred_fallthru
      _
    // Predicated region
    $region42: #{tpu_custom_call.1} parent=1 // pred_check
      _
    $region43: #{tpu_custom_call.1} parent=1 // pred_check_branch
      %94 = sbr.rel (0) target = $region45
    $region44: #{tpu_custom_call.1} parent=1 // pred_region
      %96 = dma.done [#allocation9], 128
    $region45: #{tpu_custom_call.1} parent=1 // pred_fallthru
      _
    // Predicated region
    $region46: #{tpu_custom_call.1} parent=1 // pred_check
      _
    $region47: #{tpu_custom_call.1} parent=1 // pred_check_branch
      %98 = sbr.rel (0) target = $region49
    $region48: #{tpu_custom_call.1} parent=1 // pred_region
      %100 = dma.done [#allocation9], 512
    $region49: #{tpu_custom_call.1} parent=1 // pred_fallthru
      _
    %v101 = vld [vmem:[#allocation8] sm:$0xff]
    %v102 = vld [vmem:[#allocation2] sm:$0xff]
    %v103 = vld [vmem:[#allocation10] sm:$0xff]
    %v104 = vld [vmem:[#allocation10 + $0x8] sm:$0xff]
    %v105 = vld [vmem:[#allocation10 + $0x10] sm:$0xff]
    %v106 = vld [vmem:[#allocation10 + $0x18] sm:$0xff]
    %v107 = vld [vmem:[%s5] sm:$0x1]
    %v109 = vperm.slane %v107, 0
    %vm111 = vcmask 261120
    %v113 = vsel %vm111, %v102, 0
    %115 = vmatpush.msra.mxu0 0.0
    %116 = vmatpush.msra.mxu0 0.0
    %117 = vmatpush.msra.mxu0 0.0
    %118 = vmatpush.msra.mxu0 0.0
    %119 = vmatpush.msra.mxu0 0.0
    %120 = vmatpush.msra.mxu0 0.0
    %121 = vmatpush.msra.mxu0 0.0
    %122 = vmatpush.msra.mxu0 0.0
    %123 = vmatpush.msra.mxu0 0.0
    %124 = vmatpush.msra.mxu0 0.0
    %125 = vmatpush.msra.mxu0 0.0
    %126 = vmatpush.msra.mxu0 0.0
    %127 = vmatpush.msra.mxu0 %v106
    %128 = vmatpush.msra.mxu0 %v105
    %129 = vmatpush.msra.mxu0 %v104
    %130 = vmatpush.msra.mxu0 %v103
    %131 = vmatmul.f32.gmra.mxu0 %v113
    %v132 = vpop.f32.mrf.mxu0
    %v133 = vadd.f32 %v109, %v132
    %134 = vdwg.mxu0
    %v135 = vld [vmem:[#allocation5] sm:$0xff]
    %v136 = vld [vmem:[#allocation5 + $0x8] sm:$0xff]
    %v137 = vld [vmem:[#allocation5 + $0x10] sm:$0xff]
    %v138 = vld [vmem:[#allocation5 + $0x18] sm:$0xff]
    %v139 = vld [vmem:[#allocation5 + $0x20] sm:$0xff]
    %v140 = vld [vmem:[#allocation5 + $0x28] sm:$0xff]
    %v141 = vld [vmem:[#allocation5 + $0x30] sm:$0xff]
    %v142 = vld [vmem:[#allocation5 + $0x38] sm:$0xff]
    %v143 = vld [vmem:[#allocation5 + $0x40] sm:$0xff]
    %v144 = vld [vmem:[#allocation5 + $0x48] sm:$0xff]
    %v145 = vld [vmem:[#allocation5 + $0x50] sm:$0xff]
    %v146 = vld [vmem:[#allocation5 + $0x58] sm:$0xff]
    %v147 = vld [vmem:[#allocation5 + $0x60] sm:$0xff]
    %v148 = vld [vmem:[#allocation5 + $0x68] sm:$0xff]
    %v149 = vld [vmem:[#allocation5 + $0x70] sm:$0xff]
    %v150 = vld [vmem:[#allocation5 + $0x78] sm:$0xff]
    %v152 = vrot.slane %v133, 1
    %v153 = vrot.slane %v133, 2
    %v154 = vrot.slane %v133, 3
    %v155 = vrot.slane %v133, 4
    %v156 = vrot.slane %v133, 5
    %v157 = vrot.slane %v133, 6
    %v158 = vrot.slane %v133, 7
    %v159 = vperm.slane %v133, 0
    %v160 = vperm.slane %v152, 0
    %v161 = vperm.slane %v153, 0
    %v162 = vperm.slane %v154, 0
    %v163 = vperm.slane %v155, 0
    %v164 = vperm.slane %v156, 0
    %v165 = vperm.slane %v157, 0
    %v166 = vperm.slane %v158, 0
    %v175 = vadd.f32 %v135, %v159
    %v176 = vadd.f32 %v136, %v159
    %v177 = vadd.f32 %v137, %v160
    %v178 = vadd.f32 %v138, %v160
    %v179 = vadd.f32 %v139, %v161
    %v180 = vadd.f32 %v140, %v161
    %v181 = vadd.f32 %v141, %v162
    %v182 = vadd.f32 %v142, %v162
    %v183 = vadd.f32 %v143, %v163
    %v184 = vadd.f32 %v144, %v163
    %v185 = vadd.f32 %v145, %v164
    %v186 = vadd.f32 %v146, %v164
    %v187 = vadd.f32 %v147, %v165
    %v188 = vadd.f32 %v148, %v165
    %v189 = vadd.f32 %v149, %v166
    %v190 = vadd.f32 %v150, %v166
    %v191 = vtanh.pop %v175
    %v192 = vtanh.pop %v176
    %v193 = vtanh.pop %v177
    %v194 = vtanh.pop %v178
    %v195 = vtanh.pop %v179
    %v196 = vtanh.pop %v180
    %v197 = vtanh.pop %v181
    %v198 = vtanh.pop %v182
    %v199 = vtanh.pop %v183
    %v200 = vtanh.pop %v184
    %v201 = vtanh.pop %v185
    %v202 = vtanh.pop %v186
    %v203 = vtanh.pop %v187
    %v204 = vtanh.pop %v188
    %v205 = vtanh.pop %v189
    %v206 = vtanh.pop %v190
    %v207 = vld [vmem:[%s6] sm:$0x1]
    %v209 = vperm.slane %v207, 0
    %v211 = vmul.f32 %v191, %v209
    %v212 = vmul.f32 %v192, %v209
    %v213 = vmul.f32 %v193, %v209
    %v214 = vmul.f32 %v194, %v209
    %v215 = vmul.f32 %v195, %v209
    %v216 = vmul.f32 %v196, %v209
    %v217 = vmul.f32 %v197, %v209
    %v218 = vmul.f32 %v198, %v209
    %v219 = vmul.f32 %v199, %v209
    %v220 = vmul.f32 %v200, %v209
    %v221 = vmul.f32 %v201, %v209
    %v222 = vmul.f32 %v202, %v209
    %v223 = vmul.f32 %v203, %v209
    %v224 = vmul.f32 %v204, %v209
    %v225 = vmul.f32 %v205, %v209
    %v226 = vmul.f32 %v206, %v209
    %v227 = vsel %vm111, %v211, 0.0
    %228 = vadd.xlane.f32.xlu0 %v227
    %v229 = vpop.xlane.xlu0 %228
    %v230 = vsel %vm111, %v212, 0.0
    %231 = vadd.xlane.f32.xlu0 %v230
    %v232 = vpop.xlane.xlu0 %231
    %v233 = vsel %vm111, %v213, 0.0
    %234 = vadd.xlane.f32.xlu0 %v233
    %v235 = vpop.xlane.xlu0 %234
    %v236 = vsel %vm111, %v214, 0.0
    %237 = vadd.xlane.f32.xlu0 %v236
    %v238 = vpop.xlane.xlu0 %237
    %v239 = vsel %vm111, %v215, 0.0
    %240 = vadd.xlane.f32.xlu0 %v239
    %v241 = vpop.xlane.xlu0 %240
    %v242 = vsel %vm111, %v216, 0.0
    %243 = vadd.xlane.f32.xlu0 %v242
    %v244 = vpop.xlane.xlu0 %243
    %v245 = vsel %vm111, %v217, 0.0
    %246 = vadd.xlane.f32.xlu0 %v245
    %v247 = vpop.xlane.xlu0 %246
    %v248 = vsel %vm111, %v218, 0.0
    %249 = vadd.xlane.f32.xlu0 %v248
    %v250 = vpop.xlane.xlu0 %249
    %v251 = vsel %vm111, %v219, 0.0
    %252 = vadd.xlane.f32.xlu0 %v251
    %v253 = vpop.xlane.xlu0 %252
    %v254 = vsel %vm111, %v220, 0.0
    %255 = vadd.xlane.f32.xlu0 %v254
    %v256 = vpop.xlane.xlu0 %255
    %v257 = vsel %vm111, %v221, 0.0
    %258 = vadd.xlane.f32.xlu0 %v257
    %v259 = vpop.xlane.xlu0 %258
    %v260 = vsel %vm111, %v222, 0.0
    %261 = vadd.xlane.f32.xlu0 %v260
    %v262 = vpop.xlane.xlu0 %261
    %v263 = vsel %vm111, %v223, 0.0
    %264 = vadd.xlane.f32.xlu0 %v263
    %v265 = vpop.xlane.xlu0 %264
    %v266 = vsel %vm111, %v224, 0.0
    %267 = vadd.xlane.f32.xlu0 %v266
    %v268 = vpop.xlane.xlu0 %267
    %v269 = vsel %vm111, %v225, 0.0
    %270 = vadd.xlane.f32.xlu0 %v269
    %v271 = vpop.xlane.xlu0 %270
    %v272 = vsel %vm111, %v226, 0.0
    %273 = vadd.xlane.f32.xlu0 %v272
    %v274 = vpop.xlane.xlu0 %273
    %v291 = vlaneseq
    %v292 = vand.u32 %v291, 127
    %v293 = vperm.slane %v229, %v292
    %v294 = vadd.s32 %v292, 4294967288
    %v295 = vperm.slane %v232, %v294
    %vm296 = vcmask 130112
    %v297 = vsel %vm296, %v295, %v293
    %v298 = vperm.slane %v235, %v292
    %v299 = vperm.slane %v238, %v294
    %v300 = vsel %vm296, %v299, %v298
    %v301 = vperm.slane %v241, %v292
    %v302 = vperm.slane %v244, %v294
    %v303 = vsel %vm296, %v302, %v301
    %v304 = vperm.slane %v247, %v292
    %v305 = vperm.slane %v250, %v294
    %v306 = vsel %vm296, %v305, %v304
    %v307 = vperm.slane %v253, %v292
    %v308 = vperm.slane %v256, %v294
    %v309 = vsel %vm296, %v308, %v307
    %v310 = vperm.slane %v259, %v292
    %v311 = vperm.slane %v262, %v294
    %v312 = vsel %vm296, %v311, %v310
    %v313 = vperm.slane %v265, %v292
    %v314 = vperm.slane %v268, %v294
    %v315 = vsel %vm296, %v314, %v313
    %v316 = vperm.slane %v271, %v292
    %v317 = vperm.slane %v274, %v294
    %v318 = vsel %vm296, %v317, %v316
    %vm319 = vcmask 1041409
    %v320 = vsel %vm319, %v300, %v297
    %vm321 = vcmask 1042434
    %v322 = vsel %vm321, %v303, %v320
    %vm323 = vcmask 1043459
    %v324 = vsel %vm323, %v306, %v322
    %vm325 = vcmask 1044484
    %v326 = vsel %vm325, %v309, %v324
    %vm327 = vcmask 1045509
    %v328 = vsel %vm327, %v312, %v326
    %vm329 = vcmask 1046534
    %v330 = vsel %vm329, %v315, %v328
    %vm331 = vcmask 1047559
    %v332 = vsel %vm331, %v318, %v330
    %vm334 = vcmask 130048
    %v335 = vsel %vm334, %v332, -inf
    %336 = vmax.xlane.f32.xlu0 %v335
    %v337 = vpop.xlane.xlu0 %336
    %v339 = vperm.slane %v337, 0
    %v340 = vperm.slane %v337, 1
    %v341 = vperm.slane %v337, 2
    %v342 = vperm.slane %v337, 3
    %v343 = vperm.slane %v337, 4
    %v344 = vperm.slane %v337, 5
    %v345 = vperm.slane %v337, 6
    %v346 = vperm.slane %v337, 7
    %v355 = vsub.f32 %v229, %v339
    %v356 = vsub.f32 %v232, %v339
    %v357 = vsub.f32 %v235, %v340
    %v358 = vsub.f32 %v238, %v340
    %v359 = vsub.f32 %v241, %v341
    %v360 = vsub.f32 %v244, %v341
    %v361 = vsub.f32 %v247, %v342
    %v362 = vsub.f32 %v250, %v342
    %v363 = vsub.f32 %v253, %v343
    %v364 = vsub.f32 %v256, %v343
    %v365 = vsub.f32 %v259, %v344
    %v366 = vsub.f32 %v262, %v344
    %v367 = vsub.f32 %v265, %v345
    %v368 = vsub.f32 %v268, %v345
    %v369 = vsub.f32 %v271, %v346
    %v370 = vsub.f32 %v274, %v346
    %v371 = vmul.f32 %v355, 1.442695
    %v372 = vpow.pop %v371
    %v373 = vmul.f32 %v356, 1.442695
    %v374 = vpow.pop %v373
    %v375 = vmul.f32 %v357, 1.442695
    %v376 = vpow.pop %v375
    %v377 = vmul.f32 %v358, 1.442695
    %v378 = vpow.pop %v377
    %v379 = vmul.f32 %v359, 1.442695
    %v380 = vpow.pop %v379
    %v381 = vmul.f32 %v360, 1.442695
    %v382 = vpow.pop %v381
    %v383 = vmul.f32 %v361, 1.442695
    %v384 = vpow.pop %v383
    %v385 = vmul.f32 %v362, 1.442695
    %v386 = vpow.pop %v385
    %v387 = vmul.f32 %v363, 1.442695
    %v388 = vpow.pop %v387
    %v389 = vmul.f32 %v364, 1.442695
    %v390 = vpow.pop %v389
    %v391 = vmul.f32 %v365, 1.442695
    %v392 = vpow.pop %v391
    %v393 = vmul.f32 %v366, 1.442695
    %v394 = vpow.pop %v393
    %v395 = vmul.f32 %v367, 1.442695
    %v396 = vpow.pop %v395
    %v397 = vmul.f32 %v368, 1.442695
    %v398 = vpow.pop %v397
    %v399 = vmul.f32 %v369, 1.442695
    %v400 = vpow.pop %v399
    %v401 = vmul.f32 %v370, 1.442695
    %v402 = vpow.pop %v401
    %v404 = vperm.slane %v101, 0
    %v405 = vlaneseq
    %v406 = vshrl.u32 %v405, 7
    %408 = vset.pattern.permute.xlu0 %v406
    %409 = vperm.xlu0 %408, %v404
    %v410 = vpop.permute.xlu0 %409
    %v411 = vlaneseq
    %v412 = vshrl.u32 %v411, 7
    %v413 = vadd.s32 %v412, 8
    %414 = vset.pattern.permute.xlu0 %v413
    %415 = vperm.xlu0 %414, %v404
    %v416 = vpop.permute.xlu0 %415
    %v417 = vperm.slane %v101, 1
    %v418 = vlaneseq
    %v419 = vshrl.u32 %v418, 7
    %421 = vset.pattern.permute.xlu0 %v419
    %422 = vperm.xlu0 %421, %v417
    %v423 = vpop.permute.xlu0 %422
    %v424 = vlaneseq
    %v425 = vshrl.u32 %v424, 7
    %v426 = vadd.s32 %v425, 8
    %427 = vset.pattern.permute.xlu0 %v426
    %428 = vperm.xlu0 %427, %v417
    %v429 = vpop.permute.xlu0 %428
    %v430 = vperm.slane %v101, 2
    %v431 = vlaneseq
    %v432 = vshrl.u32 %v431, 7
    %434 = vset.pattern.permute.xlu0 %v432
    %435 = vperm.xlu0 %434, %v430
    %v436 = vpop.permute.xlu0 %435
    %v437 = vlaneseq
    %v438 = vshrl.u32 %v437, 7
    %v439 = vadd.s32 %v438, 8
    %440 = vset.pattern.permute.xlu0 %v439
    %441 = vperm.xlu0 %440, %v430
    %v442 = vpop.permute.xlu0 %441
    %v443 = vperm.slane %v101, 3
    %v444 = vlaneseq
    %v445 = vshrl.u32 %v444, 7
    %447 = vset.pattern.permute.xlu0 %v445
    %448 = vperm.xlu0 %447, %v443
    %v449 = vpop.permute.xlu0 %448
    %v450 = vlaneseq
    %v451 = vshrl.u32 %v450, 7
    %v452 = vadd.s32 %v451, 8
    %453 = vset.pattern.permute.xlu0 %v452
    %454 = vperm.xlu0 %453, %v443
    %v455 = vpop.permute.xlu0 %454
    %v456 = vperm.slane %v101, 4
    %v457 = vlaneseq
    %v458 = vshrl.u32 %v457, 7
    %460 = vset.pattern.permute.xlu0 %v458
    %461 = vperm.xlu0 %460, %v456
    %v462 = vpop.permute.xlu0 %461
    %v463 = vlaneseq
    %v464 = vshrl.u32 %v463, 7
    %v465 = vadd.s32 %v464, 8
    %466 = vset.pattern.permute.xlu0 %v465
    %467 = vperm.xlu0 %466, %v456
    %v468 = vpop.permute.xlu0 %467
    %v469 = vperm.slane %v101, 5
    %v470 = vlaneseq
    %v471 = vshrl.u32 %v470, 7
    %473 = vset.pattern.permute.xlu0 %v471
    %474 = vperm.xlu0 %473, %v469
    %v475 = vpop.permute.xlu0 %474
    %v476 = vlaneseq
    %v477 = vshrl.u32 %v476, 7
    %v478 = vadd.s32 %v477, 8
    %479 = vset.pattern.permute.xlu0 %v478
    %480 = vperm.xlu0 %479, %v469
    %v481 = vpop.permute.xlu0 %480
    %v482 = vperm.slane %v101, 6
    %v483 = vlaneseq
    %v484 = vshrl.u32 %v483, 7
    %486 = vset.pattern.permute.xlu0 %v484
    %487 = vperm.xlu0 %486, %v482
    %v488 = vpop.permute.xlu0 %487
    %v489 = vlaneseq
    %v490 = vshrl.u32 %v489, 7
    %v491 = vadd.s32 %v490, 8
    %492 = vset.pattern.permute.xlu0 %v491
    %493 = vperm.xlu0 %492, %v482
    %v494 = vpop.permute.xlu0 %493
    %v495 = vperm.slane %v101, 7
    %v496 = vlaneseq
    %v497 = vshrl.u32 %v496, 7
    %499 = vset.pattern.permute.xlu0 %v497
    %500 = vperm.xlu0 %499, %v495
    %v501 = vpop.permute.xlu0 %500
    %v502 = vlaneseq
    %v503 = vshrl.u32 %v502, 7
    %v504 = vadd.s32 %v503, 8
    %505 = vset.pattern.permute.xlu0 %v504
    %506 = vperm.xlu0 %505, %v495
    %v507 = vpop.permute.xlu0 %506
    %v524 = vmul.f32 %v372, %v410
    %v525 = vmul.f32 %v374, %v416
    %v526 = vmul.f32 %v376, %v423
    %v527 = vmul.f32 %v378, %v429
    %v528 = vmul.f32 %v380, %v436
    %v529 = vmul.f32 %v382, %v442
    %v530 = vmul.f32 %v384, %v449
    %v531 = vmul.f32 %v386, %v455
    %v532 = vmul.f32 %v388, %v462
    %v533 = vmul.f32 %v390, %v468
    %v534 = vmul.f32 %v392, %v475
    %v535 = vmul.f32 %v394, %v481
    %v536 = vmul.f32 %v396, %v488
    %v537 = vmul.f32 %v398, %v494
    %v538 = vmul.f32 %v400, %v501
    %v539 = vmul.f32 %v402, %v507
    %556 = vset.pattern.permute.xlu0 0
    %557 = vperm.xlu0 %556, %v524
    %v558 = vpop.permute.xlu0 %557
    %559 = vset.pattern.permute.xlu0 0
    %560 = vperm.xlu0 %559, %v525
    %v561 = vpop.permute.xlu0 %560
    %562 = vset.pattern.permute.xlu0 0
    %563 = vperm.xlu0 %562, %v526
    %v564 = vpop.permute.xlu0 %563
    %565 = vset.pattern.permute.xlu0 0
    %566 = vperm.xlu0 %565, %v527
    %v567 = vpop.permute.xlu0 %566
    %568 = vset.pattern.permute.xlu0 0
    %569 = vperm.xlu0 %568, %v528
    %v570 = vpop.permute.xlu0 %569
    %571 = vset.pattern.permute.xlu0 0
    %572 = vperm.xlu0 %571, %v529
    %v573 = vpop.permute.xlu0 %572
    %574 = vset.pattern.permute.xlu0 0
    %575 = vperm.xlu0 %574, %v530
    %v576 = vpop.permute.xlu0 %575
    %577 = vset.pattern.permute.xlu0 0
    %578 = vperm.xlu0 %577, %v531
    %v579 = vpop.permute.xlu0 %578
    %580 = vset.pattern.permute.xlu0 0
    %581 = vperm.xlu0 %580, %v532
    %v582 = vpop.permute.xlu0 %581
    %583 = vset.pattern.permute.xlu0 0
    %584 = vperm.xlu0 %583, %v533
    %v585 = vpop.permute.xlu0 %584
    %586 = vset.pattern.permute.xlu0 0
    %587 = vperm.xlu0 %586, %v534
    %v588 = vpop.permute.xlu0 %587
    %589 = vset.pattern.permute.xlu0 0
    %590 = vperm.xlu0 %589, %v535
    %v591 = vpop.permute.xlu0 %590
    %592 = vset.pattern.permute.xlu0 0
    %593 = vperm.xlu0 %592, %v536
    %v594 = vpop.permute.xlu0 %593
    %595 = vset.pattern.permute.xlu0 0
    %596 = vperm.xlu0 %595, %v537
    %v597 = vpop.permute.xlu0 %596
    %598 = vset.pattern.permute.xlu0 0
    %599 = vperm.xlu0 %598, %v538
    %v600 = vpop.permute.xlu0 %599
    %601 = vset.pattern.permute.xlu0 0
    %602 = vperm.xlu0 %601, %v539
    %v603 = vpop.permute.xlu0 %602
    %v604 = vperm.slane %v558, %v292
    %v605 = vperm.slane %v561, %v294
    %v606 = vsel %vm296, %v605, %v604
    %v607 = vperm.slane %v564, %v292
    %v608 = vperm.slane %v567, %v294
    %v609 = vsel %vm296, %v608, %v607
    %v610 = vperm.slane %v570, %v292
    %v611 = vperm.slane %v573, %v294
    %v612 = vsel %vm296, %v611, %v610
    %v613 = vperm.slane %v576, %v292
    %v614 = vperm.slane %v579, %v294
    %v615 = vsel %vm296, %v614, %v613
    %v616 = vperm.slane %v582, %v292
    %v617 = vperm.slane %v585, %v294
    %v618 = vsel %vm296, %v617, %v616
    %v619 = vperm.slane %v588, %v292
    %v620 = vperm.slane %v591, %v294
    %v621 = vsel %vm296, %v620, %v619
    %v622 = vperm.slane %v594, %v292
    %v623 = vperm.slane %v597, %v294
    %v624 = vsel %vm296, %v623, %v622
    %v625 = vperm.slane %v600, %v292
    %v626 = vperm.slane %v603, %v294
    %v627 = vsel %vm296, %v626, %v625
    %v628 = vsel %vm319, %v609, %v606
    %v629 = vsel %vm321, %v612, %v628
    %v630 = vsel %vm323, %v615, %v629
    %v631 = vsel %vm325, %v618, %v630
    %v632 = vsel %vm327, %v621, %v631
    %v633 = vsel %vm329, %v624, %v632
    %v634 = vsel %vm331, %v627, %v633
    %v636 = vsel %vm334, %v634, 0.0
    %637 = vadd.xlane.f32.xlu0 %v636
    %v638 = vpop.xlane.xlu0 %637
    %v640 = vperm.slane %v638, 0
    %v641 = vperm.slane %v638, 1
    %v642 = vperm.slane %v638, 2
    %v643 = vperm.slane %v638, 3
    %v644 = vperm.slane %v638, 4
    %v645 = vperm.slane %v638, 5
    %v646 = vperm.slane %v638, 6
    %v647 = vperm.slane %v638, 7
    %v656 = vrcp.pop %v640
    %v657 = vmul.f32 %v640, %v656
    %v658 = vsub.f32 1.0, %v657
    %v659 = vmul.f32 %v656, %v658
    %v660 = vadd.f32 %v656, %v659
    %vm661 = vweird.f32 %v640
    %vm662 = vweird.f32 %v656
    %vm663 = vmor %vm661, %vm662
    %v664 = vsel %vm663, %v656, %v660
    %v665 = vand.u32 2147483647, %v640
    %vm666 = vcmp.eq.f32.partialorder %v665, 8.507059e+37
    %v667 = vand.u32 %v640, 2147483648
    %v668 = vor.u32 1.1754944e-38, %v667
    %v669 = vsel %vm666, %v668, %v664
    %v670 = vmul.f32 %v524, %v669
    %v671 = vmul.f32 %v525, %v669
    %v672 = vrcp.pop %v641
    %v673 = vmul.f32 %v641, %v672
    %v674 = vsub.f32 1.0, %v673
    %v675 = vmul.f32 %v672, %v674
    %v676 = vadd.f32 %v672, %v675
    %vm677 = vweird.f32 %v641
    %vm678 = vweird.f32 %v672
    %vm679 = vmor %vm677, %vm678
    %v680 = vsel %vm679, %v672, %v676
    %v681 = vand.u32 2147483647, %v641
    %vm682 = vcmp.eq.f32.partialorder %v681, 8.507059e+37
    %v683 = vand.u32 %v641, 2147483648
    %v684 = vor.u32 1.1754944e-38, %v683
    %v685 = vsel %vm682, %v684, %v680
    %v686 = vmul.f32 %v526, %v685
    %v687 = vmul.f32 %v527, %v685
    %v688 = vrcp.pop %v642
    %v689 = vmul.f32 %v642, %v688
    %v690 = vsub.f32 1.0, %v689
    %v691 = vmul.f32 %v688, %v690
    %v692 = vadd.f32 %v688, %v691
    %vm693 = vweird.f32 %v642
    %vm694 = vweird.f32 %v688
    %vm695 = vmor %vm693, %vm694
    %v696 = vsel %vm695, %v688, %v692
    %v697 = vand.u32 2147483647, %v642
    %vm698 = vcmp.eq.f32.partialorder %v697, 8.507059e+37
    %v699 = vand.u32 %v642, 2147483648
    %v700 = vor.u32 1.1754944e-38, %v699
    %v701 = vsel %vm698, %v700, %v696
    %v702 = vmul.f32 %v528, %v701
    %v703 = vmul.f32 %v529, %v701
    %v704 = vrcp.pop %v643
    %v705 = vmul.f32 %v643, %v704
    %v706 = vsub.f32 1.0, %v705
    %v707 = vmul.f32 %v704, %v706
    %v708 = vadd.f32 %v704, %v707
    %vm709 = vweird.f32 %v643
    %vm710 = vweird.f32 %v704
    %vm711 = vmor %vm709, %vm710
    %v712 = vsel %vm711, %v704, %v708
    %v713 = vand.u32 2147483647, %v643
    %vm714 = vcmp.eq.f32.partialorder %v713, 8.507059e+37
    %v715 = vand.u32 %v643, 2147483648
    %v716 = vor.u32 1.1754944e-38, %v715
    %v717 = vsel %vm714, %v716, %v712
    %v718 = vmul.f32 %v530, %v717
    %v719 = vmul.f32 %v531, %v717
    %v720 = vrcp.pop %v644
    %v721 = vmul.f32 %v644, %v720
    %v722 = vsub.f32 1.0, %v721
    %v723 = vmul.f32 %v720, %v722
    %v724 = vadd.f32 %v720, %v723
    %vm725 = vweird.f32 %v644
    %vm726 = vweird.f32 %v720
    %vm727 = vmor %vm725, %vm726
    %v728 = vsel %vm727, %v720, %v724
    %v729 = vand.u32 2147483647, %v644
    %vm730 = vcmp.eq.f32.partialorder %v729, 8.507059e+37
    %v731 = vand.u32 %v644, 2147483648
    %v732 = vor.u32 1.1754944e-38, %v731
    %v733 = vsel %vm730, %v732, %v728
    %v734 = vmul.f32 %v532, %v733
    %v735 = vmul.f32 %v533, %v733
    %v736 = vrcp.pop %v645
    %v737 = vmul.f32 %v645, %v736
    %v738 = vsub.f32 1.0, %v737
    %v739 = vmul.f32 %v736, %v738
    %v740 = vadd.f32 %v736, %v739
    %vm741 = vweird.f32 %v645
    %vm742 = vweird.f32 %v736
    %vm743 = vmor %vm741, %vm742
    %v744 = vsel %vm743, %v736, %v740
    %v745 = vand.u32 2147483647, %v645
    %vm746 = vcmp.eq.f32.partialorder %v745, 8.507059e+37
    %v747 = vand.u32 %v645, 2147483648
    %v748 = vor.u32 1.1754944e-38, %v747
    %v749 = vsel %vm746, %v748, %v744
    %v750 = vmul.f32 %v534, %v749
    %v751 = vmul.f32 %v535, %v749
    %v752 = vrcp.pop %v646
    %v753 = vmul.f32 %v646, %v752
    %v754 = vsub.f32 1.0, %v753
    %v755 = vmul.f32 %v752, %v754
    %v756 = vadd.f32 %v752, %v755
    %vm757 = vweird.f32 %v646
    %vm758 = vweird.f32 %v752
    %vm759 = vmor %vm757, %vm758
    %v760 = vsel %vm759, %v752, %v756
    %v761 = vand.u32 2147483647, %v646
    %vm762 = vcmp.eq.f32.partialorder %v761, 8.507059e+37
    %v763 = vand.u32 %v646, 2147483648
    %v764 = vor.u32 1.1754944e-38, %v763
    %v765 = vsel %vm762, %v764, %v760
    %v766 = vmul.f32 %v536, %v765
    %v767 = vmul.f32 %v537, %v765
    %v768 = vrcp.pop %v647
    %v769 = vmul.f32 %v647, %v768
    %v770 = vsub.f32 1.0, %v769
    %v771 = vmul.f32 %v768, %v770
    %v772 = vadd.f32 %v768, %v771
    %vm773 = vweird.f32 %v647
    %vm774 = vweird.f32 %v768
    %vm775 = vmor %vm773, %vm774
    %v776 = vsel %vm775, %v768, %v772
    %v777 = vand.u32 2147483647, %v647
    %vm778 = vcmp.eq.f32.partialorder %v777, 8.507059e+37
    %v779 = vand.u32 %v647, 2147483648
    %v780 = vor.u32 1.1754944e-38, %v779
    %v781 = vsel %vm778, %v780, %v776
    %v782 = vmul.f32 %v538, %v781
    %v783 = vmul.f32 %v539, %v781
    %v784 = vld [vmem:[#allocation7] sm:$0xff]
    %v785 = vld [vmem:[#allocation7 + $0x8] sm:$0xff]
    %v786 = vld [vmem:[#allocation7 + $0x10] sm:$0xff]
    %v787 = vld [vmem:[#allocation7 + $0x18] sm:$0xff]
    %v788 = vld [vmem:[#allocation7 + $0x20] sm:$0xff]
    %v789 = vld [vmem:[#allocation7 + $0x28] sm:$0xff]
    %v790 = vld [vmem:[#allocation7 + $0x30] sm:$0xff]
    %v791 = vld [vmem:[#allocation7 + $0x38] sm:$0xff]
    %v792 = vld [vmem:[#allocation7 + $0x40] sm:$0xff]
    %v793 = vld [vmem:[#allocation7 + $0x48] sm:$0xff]
    %v794 = vld [vmem:[#allocation7 + $0x50] sm:$0xff]
    %v795 = vld [vmem:[#allocation7 + $0x58] sm:$0xff]
    %v796 = vld [vmem:[#allocation7 + $0x60] sm:$0xff]
    %v797 = vld [vmem:[#allocation7 + $0x68] sm:$0xff]
    %v798 = vld [vmem:[#allocation7 + $0x70] sm:$0xff]
    %v799 = vld [vmem:[#allocation7 + $0x78] sm:$0xff]
    %802 = vset.pattern.permute.xlu0 0
    %803 = vperm.xlu0 %802, %v670
    %v804 = vpop.permute.xlu0 %803
    %805 = vset.pattern.permute.xlu0 0
    %806 = vperm.xlu0 %805, %v671
    %v807 = vpop.permute.xlu0 %806
    %v808 = vperm.slane %v804, %v292
    %v809 = vperm.slane %v807, %v294
    %v810 = vsel %vm296, %v809, %v808
    %v811 = vsel %vm334, %v810, 0
    %813 = vmatpush.msra.mxu0 0.0
    %814 = vmatpush.msra.mxu0 0.0
    %815 = vmatpush.msra.mxu0 0.0
    %816 = vmatpush.msra.mxu0 0.0
    %817 = vmatpush.msra.mxu0 0.0
    %818 = vmatpush.msra.mxu0 0.0
    %819 = vmatpush.msra.mxu0 0.0
    %820 = vmatpush.msra.mxu0 0.0
    %821 = vmatpush.msra.mxu0 0.0
    %822 = vmatpush.msra.mxu0 0.0
    %823 = vmatpush.msra.mxu0 0.0
    %824 = vmatpush.msra.mxu0 0.0
    %825 = vmatpush.msra.mxu0 0.0
    %826 = vmatpush.msra.mxu0 0.0
    %827 = vmatpush.msra.mxu0 %v785
    %828 = vmatpush.msra.mxu0 %v784
    %829 = vmatmul.f32.gmra.mxu0 %v811
    %v830 = vpop.f32.mrf.mxu0
    %v831 = vadd.f32 0.0, %v830
    %832 = vdwg.mxu0
    %835 = vset.pattern.permute.xlu0 0
    %836 = vperm.xlu0 %835, %v686
    %v837 = vpop.permute.xlu0 %836
    %838 = vset.pattern.permute.xlu0 0
    %839 = vperm.xlu0 %838, %v687
    %v840 = vpop.permute.xlu0 %839
    %v841 = vperm.slane %v837, %v292
    %v842 = vperm.slane %v840, %v294
    %v843 = vsel %vm296, %v842, %v841
    %v844 = vsel %vm334, %v843, 0
    %846 = vmatpush.msra.mxu0 0.0
    %847 = vmatpush.msra.mxu0 0.0
    %848 = vmatpush.msra.mxu0 0.0
    %849 = vmatpush.msra.mxu0 0.0
    %850 = vmatpush.msra.mxu0 0.0
    %851 = vmatpush.msra.mxu0 0.0
    %852 = vmatpush.msra.mxu0 0.0
    %853 = vmatpush.msra.mxu0 0.0
    %854 = vmatpush.msra.mxu0 0.0
    %855 = vmatpush.msra.mxu0 0.0
    %856 = vmatpush.msra.mxu0 0.0
    %857 = vmatpush.msra.mxu0 0.0
    %858 = vmatpush.msra.mxu0 0.0
    %859 = vmatpush.msra.mxu0 0.0
    %860 = vmatpush.msra.mxu0 %v787
    %861 = vmatpush.msra.mxu0 %v786
    %862 = vmatmul.f32.gmra.mxu0 %v844
    %v863 = vpop.f32.mrf.mxu0
    %v864 = vadd.f32 0.0, %v863
    %865 = vdwg.mxu0
    %868 = vset.pattern.permute.xlu0 0
    %869 = vperm.xlu0 %868, %v702
    %v870 = vpop.permute.xlu0 %869
    %871 = vset.pattern.permute.xlu0 0
    %872 = vperm.xlu0 %871, %v703
    %v873 = vpop.permute.xlu0 %872
    %v874 = vperm.slane %v870, %v292
    %v875 = vperm.slane %v873, %v294
    %v876 = vsel %vm296, %v875, %v874
    %v877 = vsel %vm334, %v876, 0
    %879 = vmatpush.msra.mxu0 0.0
    %880 = vmatpush.msra.mxu0 0.0
    %881 = vmatpush.msra.mxu0 0.0
    %882 = vmatpush.msra.mxu0 0.0
    %883 = vmatpush.msra.mxu0 0.0
    %884 = vmatpush.msra.mxu0 0.0
    %885 = vmatpush.msra.mxu0 0.0
    %886 = vmatpush.msra.mxu0 0.0
    %887 = vmatpush.msra.mxu0 0.0
    %888 = vmatpush.msra.mxu0 0.0
    %889 = vmatpush.msra.mxu0 0.0
    %890 = vmatpush.msra.mxu0 0.0
    %891 = vmatpush.msra.mxu0 0.0
    %892 = vmatpush.msra.mxu0 0.0
    %893 = vmatpush.msra.mxu0 %v789
    %894 = vmatpush.msra.mxu0 %v788
    %895 = vmatmul.f32.gmra.mxu0 %v877
    %v896 = vpop.f32.mrf.mxu0
    %v897 = vadd.f32 0.0, %v896
    %898 = vdwg.mxu0
    %901 = vset.pattern.permute.xlu0 0
    %902 = vperm.xlu0 %901, %v718
    %v903 = vpop.permute.xlu0 %902
    %904 = vset.pattern.permute.xlu0 0
    %905 = vperm.xlu0 %904, %v719
    %v906 = vpop.permute.xlu0 %905
    %v907 = vperm.slane %v903, %v292
    %v908 = vperm.slane %v906, %v294
    %v909 = vsel %vm296, %v908, %v907
    %v910 = vsel %vm334, %v909, 0
    %912 = vmatpush.msra.mxu0 0.0
    %913 = vmatpush.msra.mxu0 0.0
    %914 = vmatpush.msra.mxu0 0.0
    %915 = vmatpush.msra.mxu0 0.0
    %916 = vmatpush.msra.mxu0 0.0
    %917 = vmatpush.msra.mxu0 0.0
    %918 = vmatpush.msra.mxu0 0.0
    %919 = vmatpush.msra.mxu0 0.0
    %920 = vmatpush.msra.mxu0 0.0
    %921 = vmatpush.msra.mxu0 0.0
    %922 = vmatpush.msra.mxu0 0.0
    %923 = vmatpush.msra.mxu0 0.0
    %924 = vmatpush.msra.mxu0 0.0
    %925 = vmatpush.msra.mxu0 0.0
    %926 = vmatpush.msra.mxu0 %v791
    %927 = vmatpush.msra.mxu0 %v790
    %928 = vmatmul.f32.gmra.mxu0 %v910
    %v929 = vpop.f32.mrf.mxu0
    %v930 = vadd.f32 0.0, %v929
    %931 = vdwg.mxu0
    %934 = vset.pattern.permute.xlu0 0
    %935 = vperm.xlu0 %934, %v734
    %v936 = vpop.permute.xlu0 %935
    %937 = vset.pattern.permute.xlu0 0
    %938 = vperm.xlu0 %937, %v735
    %v939 = vpop.permute.xlu0 %938
    %v940 = vperm.slane %v936, %v292
    %v941 = vperm.slane %v939, %v294
    %v942 = vsel %vm296, %v941, %v940
    %v943 = vsel %vm334, %v942, 0
    %945 = vmatpush.msra.mxu0 0.0
    %946 = vmatpush.msra.mxu0 0.0
    %947 = vmatpush.msra.mxu0 0.0
    %948 = vmatpush.msra.mxu0 0.0
    %949 = vmatpush.msra.mxu0 0.0
    %950 = vmatpush.msra.mxu0 0.0
    %951 = vmatpush.msra.mxu0 0.0
    %952 = vmatpush.msra.mxu0 0.0
    %953 = vmatpush.msra.mxu0 0.0
    %954 = vmatpush.msra.mxu0 0.0
    %955 = vmatpush.msra.mxu0 0.0
    %956 = vmatpush.msra.mxu0 0.0
    %957 = vmatpush.msra.mxu0 0.0
    %958 = vmatpush.msra.mxu0 0.0
    %959 = vmatpush.msra.mxu0 %v793
    %960 = vmatpush.msra.mxu0 %v792
    %961 = vmatmul.f32.gmra.mxu0 %v943
    %v962 = vpop.f32.mrf.mxu0
    %v963 = vadd.f32 0.0, %v962
    %964 = vdwg.mxu0
    %967 = vset.pattern.permute.xlu0 0
    %968 = vperm.xlu0 %967, %v750
    %v969 = vpop.permute.xlu0 %968
    %970 = vset.pattern.permute.xlu0 0
    %971 = vperm.xlu0 %970, %v751
    %v972 = vpop.permute.xlu0 %971
    %v973 = vperm.slane %v969, %v292
    %v974 = vperm.slane %v972, %v294
    %v975 = vsel %vm296, %v974, %v973
    %v976 = vsel %vm334, %v975, 0
    %978 = vmatpush.msra.mxu0 0.0
    %979 = vmatpush.msra.mxu0 0.0
    %980 = vmatpush.msra.mxu0 0.0
    %981 = vmatpush.msra.mxu0 0.0
    %982 = vmatpush.msra.mxu0 0.0
    %983 = vmatpush.msra.mxu0 0.0
    %984 = vmatpush.msra.mxu0 0.0
    %985 = vmatpush.msra.mxu0 0.0
    %986 = vmatpush.msra.mxu0 0.0
    %987 = vmatpush.msra.mxu0 0.0
    %988 = vmatpush.msra.mxu0 0.0
    %989 = vmatpush.msra.mxu0 0.0
    %990 = vmatpush.msra.mxu0 0.0
    %991 = vmatpush.msra.mxu0 0.0
    %992 = vmatpush.msra.mxu0 %v795
    %993 = vmatpush.msra.mxu0 %v794
    %994 = vmatmul.f32.gmra.mxu0 %v976
    %v995 = vpop.f32.mrf.mxu0
    %v996 = vadd.f32 0.0, %v995
    %997 = vdwg.mxu0
    %1000 = vset.pattern.permute.xlu0 0
    %1001 = vperm.xlu0 %1000, %v766
    %v1002 = vpop.permute.xlu0 %1001
    %1003 = vset.pattern.permute.xlu0 0
    %1004 = vperm.xlu0 %1003, %v767
    %v1005 = vpop.permute.xlu0 %1004
    %v1006 = vperm.slane %v1002, %v292
    %v1007 = vperm.slane %v1005, %v294
    %v1008 = vsel %vm296, %v1007, %v1006
    %v1009 = vsel %vm334, %v1008, 0
    %1011 = vmatpush.msra.mxu0 0.0
    %1012 = vmatpush.msra.mxu0 0.0
    %1013 = vmatpush.msra.mxu0 0.0
    %1014 = vmatpush.msra.mxu0 0.0
    %1015 = vmatpush.msra.mxu0 0.0
    %1016 = vmatpush.msra.mxu0 0.0
    %1017 = vmatpush.msra.mxu0 0.0
    %1018 = vmatpush.msra.mxu0 0.0
    %1019 = vmatpush.msra.mxu0 0.0
    %1020 = vmatpush.msra.mxu0 0.0
    %1021 = vmatpush.msra.mxu0 0.0
    %1022 = vmatpush.msra.mxu0 0.0
    %1023 = vmatpush.msra.mxu0 0.0
    %1024 = vmatpush.msra.mxu0 0.0
    %1025 = vmatpush.msra.mxu0 %v797
    %1026 = vmatpush.msra.mxu0 %v796
    %1027 = vmatmul.f32.gmra.mxu0 %v1009
    %v1028 = vpop.f32.mrf.mxu0
    %v1029 = vadd.f32 0.0, %v1028
    %1030 = vdwg.mxu0
    %1033 = vset.pattern.permute.xlu0 0
    %1034 = vperm.xlu0 %1033, %v782
    %v1035 = vpop.permute.xlu0 %1034
    %1036 = vset.pattern.permute.xlu0 0
    %1037 = vperm.xlu0 %1036, %v783
    %v1038 = vpop.permute.xlu0 %1037
    %v1039 = vperm.slane %v1035, %v292
    %v1040 = vperm.slane %v1038, %v294
    %v1041 = vsel %vm296, %v1040, %v1039
    %v1042 = vsel %vm334, %v1041, 0
    %1044 = vmatpush.msra.mxu0 0.0
    %1045 = vmatpush.msra.mxu0 0.0
    %1046 = vmatpush.msra.mxu0 0.0
    %1047 = vmatpush.msra.mxu0 0.0
    %1048 = vmatpush.msra.mxu0 0.0
    %1049 = vmatpush.msra.mxu0 0.0
    %1050 = vmatpush.msra.mxu0 0.0
    %1051 = vmatpush.msra.mxu0 0.0
    %1052 = vmatpush.msra.mxu0 0.0
    %1053 = vmatpush.msra.mxu0 0.0
    %1054 = vmatpush.msra.mxu0 0.0
    %1055 = vmatpush.msra.mxu0 0.0
    %1056 = vmatpush.msra.mxu0 0.0
    %1057 = vmatpush.msra.mxu0 0.0
    %1058 = vmatpush.msra.mxu0 %v799
    %1059 = vmatpush.msra.mxu0 %v798
    %1060 = vmatmul.f32.gmra.mxu0 %v1042
    %v1061 = vpop.f32.mrf.mxu0
    %v1062 = vadd.f32 0.0, %v1061
    %1063 = vdwg.mxu0
    %v1072 = vrot.slane %v864, 7
    %v1073 = vsel %vm319, %v1072, %v831
    %v1074 = vrot.slane %v897, 6
    %v1075 = vsel %vm321, %v1074, %v1073
    %v1076 = vrot.slane %v930, 5
    %v1077 = vsel %vm323, %v1076, %v1075
    %v1078 = vrot.slane %v963, 4
    %v1079 = vsel %vm325, %v1078, %v1077
    %v1080 = vrot.slane %v996, 3
    %v1081 = vsel %vm327, %v1080, %v1079
    %v1082 = vrot.slane %v1029, 2
    %v1083 = vsel %vm329, %v1082, %v1081
    %v1084 = vrot.slane %v1062, 1
    %v1085 = vsel %vm331, %v1084, %v1083
    %1087 = vst.msk [vmem:[#allocation11] sm:$0xff] %vm111, %v1085
    // Predicated region
    $region50: #{tpu_custom_call.1} parent=1 // pred_check
      _
    $region51: #{tpu_custom_call.1} parent=1 // pred_check_branch
      %1089 = sbr.rel (0) target = $region53
    $region52: #{tpu_custom_call.1} parent=1 // pred_region
      %1091 = vsyncadd [#allocation4], 0
      %s1093 = sshll.u32 [#allocation11], 4
      %s1094 = int_to_ptr.vmem [resolvable:$true] %s1093
      %s1095 = sshll.u32 %s7, 4
      %s1096 = int_to_ptr.hbm [resolvable:$true] %s1095
      %1098 = dma.vmem_to_hbm [thread:$0]  %s1094, 128, %s1096, [#allocation4]
    $region53: #{tpu_custom_call.1} parent=1 // pred_fallthru
      _
    // Predicated region
    $region54: #{tpu_custom_call.1} parent=1 // pred_check
      _
    $region55: #{tpu_custom_call.1} parent=1 // pred_check_branch
      %1100 = sbr.rel (0) target = $region57
    $region56: #{tpu_custom_call.1} parent=1 // pred_region
      %1102 = dma.done [#allocation4], 128
    $region57: #{tpu_custom_call.1} parent=1 // pred_fallthru
      _
    %1103 = vsyncpa [#allocation3], 1
    %1104 = vsyncpa [#allocation6], 1
    %1105 = vsyncpa [#allocation9], 1
    %1106 = vsyncpa [#allocation4], 1

</llo_original>
